<compile_context>
chip_gen: v7x
topology: tpu7x:2x2x1
jax: 0.10.0
libtpu: 0.0.40
codegen_flags: <defaults>
</compile_context>

<pallas_src>
import functools

import jax
import jax.numpy as jnp
from jax.experimental import pallas as pl
from jax.experimental.pallas import tpu as pltpu


def _round_up(n, m):
    return ((n + m - 1) // m) * m


def mlp_forecast_kernel(x_ref, w1_ref, b1_ref, w2_ref, b2_ref, out_ref):
    # x_ref : (bm, I)  bf16      w1_ref: (I, Hp)  bf16    b1_ref: (1, Hp) f32
    # w2_ref: (Hp, Op) bf16      b2_ref: (1, Op)  f32     out_ref:(bm, Op) f32
    pre = jnp.dot(x_ref[...], w1_ref[...],
                  preferred_element_type=jnp.float32) + b1_ref[...]
    # sigmoid = 1 / (1 + exp(-pre)): exp and approx-reciprocal both go to the EUP,
    # keeping the VALU slots free for the bias adds / casts.
    h = pl.reciprocal(1.0 + jnp.exp(-pre), approx=True)
    y = jnp.dot(h.astype(jnp.bfloat16), w2_ref[...],
                preferred_element_type=jnp.float32) + b2_ref[...]
    out_ref[...] = y.astype(out_ref.dtype)


def _mlp_forecast_impl(x, w1, b1, w2, b2, *, block_m=512):
    """MLPForecast forward: fc2(sigmoid(fc1(x))).

    x: (..., input_dim).  Weights in PyTorch convention:
      w1: (H, I), b1: (H,), w2: (O, H), b2: (O,).
    """
    orig_shape = x.shape
    I = orig_shape[-1]
    H, O = w1.shape[0], w2.shape[0]

    # Lane-dense hidden/output widths (pad on the weight side only; zero columns of
    # W1^T give sigmoid(0+0)=0.5 in the padded hidden lanes, but the matching zero
    # rows of W2^T kill their contribution, so the math is exact).
    Hp = _round_up(H, 128)
    Op = _round_up(O, 128)

    # Flatten leading dims into rows; feed the MXU bf16.  No row padding -- Pallas
    # masks the ragged final row block.
    x2 = x.reshape(-1, I).astype(jnp.bfloat16)
    M = x2.shape[0]

    # Row tile: multiple of 8 sublanes, capped so large M yields >=2 blocks for the
    # v7x megacore to split across its two TensorCores.
    bm = max(8, min(block_m, _round_up(pl.cdiv(M, 2), 8)))
    grid_m = pl.cdiv(M, bm)

    # Weight prep (tiny, constant, fused under jit): transpose + zero-pad + bf16.
    w1_t = jnp.zeros((I, Hp), jnp.bfloat16).at[:, :H].set(w1.T.astype(jnp.bfloat16))
    b1_p = jnp.zeros((1, Hp), jnp.float32).at[:, :H].set(b1.astype(jnp.float32)[None, :])
    w2_t = jnp.zeros((Hp, Op), jnp.bfloat16).at[:H, :O].set(w2.T.astype(jnp.bfloat16))
    b2_p = jnp.zeros((1, Op), jnp.float32).at[:, :O].set(b2.astype(jnp.float32)[None, :])

    # Explicit VMEM budget: resident weights + double-buffered x/out tiles + margin.
    weights_bytes = (I * Hp + Hp * Op) * 2 + (Hp + Op) * 4
    tile_bytes = 2 * bm * I * 2 + 2 * bm * Op * 4
    vmem_limit = min(100 << 20, weights_bytes + tile_bytes + (8 << 20))

    cost = pl.CostEstimate(
        flops=2 * M * (I * H + H * O),
        transcendentals=M * H,
        bytes_accessed=M * I * 2 + I * Hp * 2 + Hp * Op * 2 + (Hp + Op) * 4 + M * Op * 4,
    )

    full = lambda i: (0, 0)

    out = pl.pallas_call(
        mlp_forecast_kernel,
        out_shape=jax.ShapeDtypeStruct((M, Op), jnp.float32),
        grid_spec=pltpu.PrefetchScalarGridSpec(
            num_scalar_prefetch=0,
            grid=(grid_m,),
            in_specs=[
                pl.BlockSpec((bm, I), lambda i: (i, 0)),   # x rows (pipelined)
                pl.BlockSpec((I, Hp), full),               # W1^T  (VMEM-resident)
                pl.BlockSpec((1, Hp), full),               # b1
                pl.BlockSpec((Hp, Op), full),              # W2^T  (VMEM-resident)
                pl.BlockSpec((1, Op), full),               # b2
            ],
            out_specs=pl.BlockSpec((bm, Op), lambda i: (i, 0)),
        ),
        compiler_params=pltpu.CompilerParams(
            dimension_semantics=("parallel",),             # row tiles are independent
            vmem_limit_bytes=vmem_limit,
        ),
        cost_estimate=cost,
    )(x2, w1_t, b1_p, w2_t, b2_p)

    return out[:, :O].reshape(*orig_shape[:-1], O)


# jit the whole wrapper so the weight cast/pad/transpose and the lane-slice on the
# output don't become standalone HBM round-trips.
mlp_forecast = jax.jit(_mlp_forecast_impl, static_argnames=("block_m",))


def mlp_forecast_ref(x, w1, b1, w2, b2):
    """Pure-JAX f32 reference matching PyTorch Linear -> Sigmoid -> Linear."""
    h = 1.0 / (1.0 + jnp.exp(-(x @ w1.T + b1)))
    return h @ w2.T + b2


if __name__ == "__main__":
    BATCH, INPUT_DIM, HIDDEN_DIM, OUTPUT_DIM = 8, 16, 32, 8

    key = jax.random.PRNGKey(0)
    ks = jax.random.split(key, 5)
    x = jax.random.normal(ks[0], (BATCH, INPUT_DIM), jnp.float32)

    # Deterministic PyTorch-like uniform init.
    bound1 = 1.0 / (INPUT_DIM ** 0.5)
    bound2 = 1.0 / (HIDDEN_DIM ** 0.5)
    w1 = jax.random.uniform(ks[1], (HIDDEN_DIM, INPUT_DIM), jnp.float32, -bound1, bound1)
    b1 = jax.random.uniform(ks[2], (HIDDEN_DIM,), jnp.float32, -bound1, bound1)
    w2 = jax.random.uniform(ks[3], (OUTPUT_DIM, HIDDEN_DIM), jnp.float32, -bound2, bound2)
    b2 = jax.random.uniform(ks[4], (OUTPUT_DIM,), jnp.float32, -bound2, bound2)

    out = jax.block_until_ready(mlp_forecast(x, w1, b1, w2, b2))
    ref = mlp_forecast_ref(x, w1, b1, w2, b2)

    assert out.shape == (BATCH, OUTPUT_DIM), out.shape
    max_err = float(jnp.max(jnp.abs(out - ref)))
    # bf16 MXU inputs + approx reciprocal => compare with a matching tolerance.
    assert max_err < 3e-2, max_err

    print("KERNEL_OK")
</pallas_src>

<mosaic_0001>
module attributes {stable_mosaic.version = 11 : i64} {
  func.func @mlp_forecast_kernel(%arg0: i32, %arg1: memref<8x16xbf16, #tpu.memory_space<vmem>>, %arg2: memref<16x128xbf16, #tpu.memory_space<vmem>>, %arg3: memref<1x128xf32, #tpu.memory_space<vmem>>, %arg4: memref<128x128xbf16, #tpu.memory_space<vmem>>, %arg5: memref<1x128xf32, #tpu.memory_space<vmem>>, %arg6: memref<8x128xf32, #tpu.memory_space<vmem>>) attributes {dimension_semantics = [#tpu.dimension_semantics<parallel>], iteration_bounds = array<i64: 1>, scalar_prefetch = 0 : i64, scratch_operands = 0 : i64, tpu.core_type = #tpu.core_type<tc>, window_params = [{transform_indices = @transform_0, window_bounds = array<i64: 8, 16>}, {pipeline_mode = #tpu.pipeline_mode<synchronous>, transform_indices = @transform_1, window_bounds = array<i64: 16, 128>}, {pipeline_mode = #tpu.pipeline_mode<synchronous>, transform_indices = @transform_2, window_bounds = array<i64: 1, 128>}, {pipeline_mode = #tpu.pipeline_mode<synchronous>, transform_indices = @transform_3, window_bounds = array<i64: 128, 128>}, {pipeline_mode = #tpu.pipeline_mode<synchronous>, transform_indices = @transform_4, window_bounds = array<i64: 1, 128>}, {transform_indices = @transform_5, window_bounds = array<i64: 8, 128>}]} {
    %c0 = arith.constant 0 : index
    %c0_0 = arith.constant 0 : index
    %0 = vector.load %arg1[%c0, %c0_0] : memref<8x16xbf16, #tpu.memory_space<vmem>>, vector<8x16xbf16>
    %c0_1 = arith.constant 0 : index
    %c0_2 = arith.constant 0 : index
    %1 = vector.load %arg2[%c0_1, %c0_2] : memref<16x128xbf16, #tpu.memory_space<vmem>>, vector<16x128xbf16>
    %cst = arith.constant dense<0.000000e+00> : vector<8x128xf32>
    %2 = tpu.matmul %0, %1, %cst {dimension_numbers = #tpu.dot_dimension_numbers<[1], [0], [0], [1], [0, 0, 1, 1], [], []>} : vector<8x16xbf16>, vector<16x128xbf16>, vector<8x128xf32> -> vector<8x128xf32>
    %c0_3 = arith.constant 0 : index
    %c0_4 = arith.constant 0 : index
    %3 = vector.load %arg3[%c0_3, %c0_4] : memref<1x128xf32, #tpu.memory_space<vmem>>, vector<1x128xf32>
    %4 = vector.broadcast %3 : vector<1x128xf32> to vector<8x128xf32>
    %5 = arith.addf %2, %4 : vector<8x128xf32>
    %cst_5 = arith.constant 0.000000e+00 : f32
    %6 = vector.broadcast %cst_5 : f32 to vector<8x128xf32>
    %7 = arith.subf %6, %5 : vector<8x128xf32>
    %8 = math.exp %7 : vector<8x128xf32>
    %cst_6 = arith.constant 1.000000e+00 : f32
    %9 = vector.broadcast %cst_6 : f32 to vector<8x128xf32>
    %10 = arith.addf %9, %8 : vector<8x128xf32>
    %11 = tpu.reciprocal %10 {approx = true} : vector<8x128xf32> -> vector<8x128xf32>
    %12 = arith.truncf %11 : vector<8x128xf32> to vector<8x128xbf16>
    %c0_7 = arith.constant 0 : index
    %c0_8 = arith.constant 0 : index
    %13 = vector.load %arg4[%c0_7, %c0_8] : memref<128x128xbf16, #tpu.memory_space<vmem>>, vector<128x128xbf16>
    %cst_9 = arith.constant dense<0.000000e+00> : vector<8x128xf32>
    %14 = tpu.matmul %12, %13, %cst_9 {dimension_numbers = #tpu.dot_dimension_numbers<[1], [0], [0], [1], [0, 0, 1, 1], [], []>} : vector<8x128xbf16>, vector<128x128xbf16>, vector<8x128xf32> -> vector<8x128xf32>
    %c0_10 = arith.constant 0 : index
    %c0_11 = arith.constant 0 : index
    %15 = vector.load %arg5[%c0_10, %c0_11] : memref<1x128xf32, #tpu.memory_space<vmem>>, vector<1x128xf32>
    %16 = vector.broadcast %15 : vector<1x128xf32> to vector<8x128xf32>
    %17 = arith.addf %14, %16 : vector<8x128xf32>
    %c0_12 = arith.constant 0 : index
    %c0_13 = arith.constant 0 : index
    %18 = vector.load %arg6[%c0_12, %c0_13] : memref<8x128xf32, #tpu.memory_space<vmem>>, vector<8x128xf32>
    tpu.vector_store %arg6[%c0_12, %c0_13], %17 {strides = array<i32>} : memref<8x128xf32, #tpu.memory_space<vmem>>, vector<8x128xf32>,
    return
  }
  func.func @transform_0(%arg0: i32) -> (i32, i32) {
    %c0_i32 = arith.constant 0 : i32
    %c0_i32_0 = arith.constant 0 : i32
    return %arg0, %c0_i32 : i32, i32
  }
  func.func @transform_1(%arg0: i32) -> (i32, i32) {
    %c0_i32 = arith.constant 0 : i32
    %c0_i32_0 = arith.constant 0 : i32
    %c0_i32_1 = arith.constant 0 : i32
    return %c0_i32, %c0_i32_0 : i32, i32
  }
  func.func @transform_2(%arg0: i32) -> (i32, i32) {
    %c0_i32 = arith.constant 0 : i32
    %c0_i32_0 = arith.constant 0 : i32
    %c0_i32_1 = arith.constant 0 : i32
    return %c0_i32, %c0_i32_0 : i32, i32
  }
  func.func @transform_3(%arg0: i32) -> (i32, i32) {
    %c0_i32 = arith.constant 0 : i32
    %c0_i32_0 = arith.constant 0 : i32
    %c0_i32_1 = arith.constant 0 : i32
    return %c0_i32, %c0_i32_0 : i32, i32
  }
  func.func @transform_4(%arg0: i32) -> (i32, i32) {
    %c0_i32 = arith.constant 0 : i32
    %c0_i32_0 = arith.constant 0 : i32
    %c0_i32_1 = arith.constant 0 : i32
    return %c0_i32, %c0_i32_0 : i32, i32
  }
  func.func @transform_5(%arg0: i32) -> (i32, i32) {
    %c0_i32 = arith.constant 0 : i32
    %c0_i32_0 = arith.constant 0 : i32
    return %arg0, %c0_i32 : i32, i32
  }
}

</mosaic_0001>

<llo_original>
// kernel: _mlp_forecast_impl.1
$region0: #{_mlp_forecast_impl.1}
  #allocation0 [shape = 'u32[]', space=smem, size = 0x4, offset = 0x4, fixed_abs, tag = 'smem constant byte address 0x4 - core index']
  #allocation1 [shape = 'u32[144,128]{1,0:T(1,128)}', space=vmem, size = 0x12000, scoped, tag = 'internal scratch']
  %s0 = inlined_call_operand.vmem [shape: bf16[8,16], index: 0, kind: input, shape index: {}]
  %s1 = inlined_call_operand.vmem [shape: bf16[16,128], index: 1, kind: input, shape index: {}]
  %s2 = inlined_call_operand.vmem [shape: f32[1,128], index: 2, kind: input, shape index: {}]
  %s3 = inlined_call_operand.vmem [shape: bf16[128,128], index: 3, kind: input, shape index: {}]
  %s4 = inlined_call_operand.vmem [shape: f32[1,128], index: 4, kind: input, shape index: {}]
  %s5 = inlined_call_operand.hbm [shape: f32[8,128], index: 5, kind: output, shape index: {}]
  %s6 = sld [smem:[#allocation0]]
  $region30: #{_mlp_forecast_impl.1} parent=0
    _
  %s8 = ssub.s32 1, %s6
  %s9 = scalar_select 0, %s8, %s6
  $region1: #{_mlp_forecast_impl.1} parent=0
    #allocation2 [shape = 'u8[4096]{0}', space=vmem, size = 0x1000, scoped, tag = 'output window, operand 0, single buffered']
    #allocation3 [shape = 's32[1]{0}', space=sflag, size = 0x4, scoped, tag = 'scoped memory for _mlp_forecast_impl.1']
    %10 = vsyncpa [#allocation3], 0
    // Predicated region
    $region2: #{_mlp_forecast_impl.1} parent=1 // pred_check
      _
    $region3: #{_mlp_forecast_impl.1} parent=1 // pred_check_branch
      %12 = sbr.rel (0) target = $region5
    $region4: #{_mlp_forecast_impl.1} parent=1 // pred_region
      _
    $region5: #{_mlp_forecast_impl.1} parent=1 // pred_fallthru
      _
    // Predicated region
    $region6: #{_mlp_forecast_impl.1} parent=1 // pred_check
      _
    $region7: #{_mlp_forecast_impl.1} parent=1 // pred_check_branch
      %14 = sbr.rel (0) target = $region9
    $region8: #{_mlp_forecast_impl.1} parent=1 // pred_region
      _
    $region9: #{_mlp_forecast_impl.1} parent=1 // pred_fallthru
      _
    // Predicated region
    $region10: #{_mlp_forecast_impl.1} parent=1 // pred_check
      _
    $region11: #{_mlp_forecast_impl.1} parent=1 // pred_check_branch
      %16 = sbr.rel (0) target = $region13
    $region12: #{_mlp_forecast_impl.1} parent=1 // pred_region
      _
    $region13: #{_mlp_forecast_impl.1} parent=1 // pred_fallthru
      _
    // Predicated region
    $region14: #{_mlp_forecast_impl.1} parent=1 // pred_check
      _
    $region15: #{_mlp_forecast_impl.1} parent=1 // pred_check_branch
      %18 = sbr.rel (0) target = $region17
    $region16: #{_mlp_forecast_impl.1} parent=1 // pred_region
      _
    $region17: #{_mlp_forecast_impl.1} parent=1 // pred_fallthru
      _
    // Predicated region
    $region18: #{_mlp_forecast_impl.1} parent=1 // pred_check
      _
    $region19: #{_mlp_forecast_impl.1} parent=1 // pred_check_branch
      %20 = sbr.rel (0) target = $region21
    $region20: #{_mlp_forecast_impl.1} parent=1 // pred_region
      _
    $region21: #{_mlp_forecast_impl.1} parent=1 // pred_fallthru
      _
    %v22 = vld [vmem:[%s0] sm:$0xf]
    %v23 = vld [vmem:[%s1] sm:$0xf]
    %v24 = vld [vmem:[%s1 + $0x4] sm:$0xf]
    %v25 = vld [vmem:[%s2] sm:$0x1]
    %v27 = vlaneseq
    %v28 = vshrl.u32 %v27, 7
    %v29 = vsub.s32 0, %v28
    %v30 = vrot.slane %v25, %v29
    %v34 = vunpack.c.l.b16 %v23
    %v35 = vunpack.c.l.b16 %v24
    %v36 = vpack.c.b16 %v35, %v34
    %vm38 = vcmask 130048
    %v40 = vsel %vm38, %v22, 0
    %42 = vmatprep.subr.bf16.mxu0 0
    %43 = vmatpush1.bf16.msra.mxu0 %v36
    %44 = vmatprep.subr.bf16.mxu0 0
    %45 = vmatpush1.bf16.msra.mxu0 0
    %46 = vmatprep.subr.bf16.mxu0 0
    %47 = vmatpush1.bf16.msra.mxu0 0
    %48 = vmatprep.subr.bf16.mxu0 0
    %49 = vmatpush1.bf16.msra.mxu0 0
    %50 = vmatprep.subr.bf16.mxu0 0
    %51 = vmatpush1.bf16.msra.mxu0 0
    %52 = vmatprep.subr.bf16.mxu0 0
    %53 = vmatpush1.bf16.msra.mxu0 0
    %54 = vmatprep.subr.bf16.mxu0 0
    %55 = vmatpush1.bf16.msra.mxu0 0
    %56 = vmatprep.subr.bf16.mxu0 0
    %57 = vmatpush1.bf16.msra.mxu0 0
    %58 = vmatprep.subr.bf16.mxu0 0
    %59 = vmatpush1.bf16.msra.mxu0 0
    %60 = vmatprep.subr.bf16.mxu0 0
    %61 = vmatpush1.bf16.msra.mxu0 0
    %62 = vmatprep.subr.bf16.mxu0 0
    %63 = vmatpush1.bf16.msra.mxu0 0
    %64 = vmatprep.subr.bf16.mxu0 0
    %65 = vmatpush1.bf16.msra.mxu0 0
    %66 = vmatprep.subr.bf16.mxu0 0
    %67 = vmatpush1.bf16.msra.mxu0 0
    %68 = vmatprep.subr.bf16.mxu0 0
    %69 = vmatpush1.bf16.msra.mxu0 0
    %70 = vmatprep.subr.bf16.mxu0 0
    %71 = vmatpush1.bf16.msra.mxu0 0
    %72 = vmatprep.subr.bf16.mxu0 0
    %73 = vmatpush1.bf16.msra.mxu0 0
    %74 = vmatprep.mubr.bf16.mxu0 0
    %75 = vmatmul.mubr.bf16.gmra.mrb[0].mxu0 %v40
    %v76 = vpop.f32.mrb[0].mxu0
    %v77 = vadd.f32 %v30, %v76
    %v78 = vpop.f32.mrb[0].mxu0
    %v79 = vpop.f32.mrb[0].mxu0
    %v80 = vpop.f32.mrb[0].mxu0
    %81 = vdwg.mxu0
    %v82 = vsub.f32 0.0, %v77
    %v83 = vmul.f32 %v82, 1.442695
    %v84 = vpow.pop %v83
    %v85 = vadd.f32 %v84, 1.0
    %v86 = vrcp.pop %v85
    %v87 = vpack.c.bf16 %v86, %v86
    %v88 = vld [vmem:[%s3] sm:$0xf]
    %v89 = vld [vmem:[%s3 + $0x4] sm:$0xf]
    %v90 = vld [vmem:[%s3 + $0x8] sm:$0xf]
    %v91 = vld [vmem:[%s3 + $0xc] sm:$0xf]
    %v92 = vld [vmem:[%s3 + $0x10] sm:$0xf]
    %v93 = vld [vmem:[%s3 + $0x14] sm:$0xf]
    %v94 = vld [vmem:[%s3 + $0x18] sm:$0xf]
    %v95 = vld [vmem:[%s3 + $0x1c] sm:$0xf]
    %v96 = vld [vmem:[%s3 + $0x20] sm:$0xf]
    %v97 = vld [vmem:[%s3 + $0x24] sm:$0xf]
    %v98 = vld [vmem:[%s3 + $0x28] sm:$0xf]
    %v99 = vld [vmem:[%s3 + $0x2c] sm:$0xf]
    %v100 = vld [vmem:[%s3 + $0x30] sm:$0xf]
    %v101 = vld [vmem:[%s3 + $0x34] sm:$0xf]
    %v102 = vld [vmem:[%s3 + $0x38] sm:$0xf]
    %v103 = vld [vmem:[%s3 + $0x3c] sm:$0xf]
    %v104 = vld [vmem:[%s4] sm:$0x1]
    %v106 = vlaneseq
    %v107 = vshrl.u32 %v106, 7
    %v108 = vsub.s32 0, %v107
    %v109 = vrot.slane %v104, %v108
    %v127 = vunpack.c.l.b16 %v88
    %v128 = vunpack.c.l.b16 %v89
    %v129 = vunpack.c.l.b16 %v90
    %v130 = vunpack.c.l.b16 %v91
    %v131 = vunpack.c.l.b16 %v92
    %v132 = vunpack.c.l.b16 %v93
    %v133 = vunpack.c.l.b16 %v94
    %v134 = vunpack.c.l.b16 %v95
    %v135 = vunpack.c.l.b16 %v96
    %v136 = vunpack.c.l.b16 %v97
    %v137 = vunpack.c.l.b16 %v98
    %v138 = vunpack.c.l.b16 %v99
    %v139 = vunpack.c.l.b16 %v100
    %v140 = vunpack.c.l.b16 %v101
    %v141 = vunpack.c.l.b16 %v102
    %v142 = vunpack.c.l.b16 %v103
    %v143 = vpack.c.b16 %v128, %v127
    %v144 = vpack.c.b16 %v130, %v129
    %v145 = vpack.c.b16 %v132, %v131
    %v146 = vpack.c.b16 %v134, %v133
    %v147 = vpack.c.b16 %v136, %v135
    %v148 = vpack.c.b16 %v138, %v137
    %v149 = vpack.c.b16 %v140, %v139
    %v150 = vpack.c.b16 %v142, %v141
    %159 = vmatprep.subr.bf16.mxu0 0
    %160 = vmatpush1.bf16.msra.mxu0 %v143
    %161 = vmatprep.subr.bf16.mxu0 0
    %162 = vmatpush1.bf16.msra.mxu0 %v144
    %163 = vmatprep.subr.bf16.mxu0 0
    %164 = vmatpush1.bf16.msra.mxu0 %v145
    %165 = vmatprep.subr.bf16.mxu0 0
    %166 = vmatpush1.bf16.msra.mxu0 %v146
    %167 = vmatprep.subr.bf16.mxu0 0
    %168 = vmatpush1.bf16.msra.mxu0 %v147
    %169 = vmatprep.subr.bf16.mxu0 0
    %170 = vmatpush1.bf16.msra.mxu0 %v148
    %171 = vmatprep.subr.bf16.mxu0 0
    %172 = vmatpush1.bf16.msra.mxu0 %v149
    %173 = vmatprep.subr.bf16.mxu0 0
    %174 = vmatpush1.bf16.msra.mxu0 %v150
    %175 = vmatprep.subr.bf16.mxu0 0
    %176 = vmatpush1.bf16.msra.mxu0 0
    %177 = vmatprep.subr.bf16.mxu0 0
    %178 = vmatpush1.bf16.msra.mxu0 0
    %179 = vmatprep.subr.bf16.mxu0 0
    %180 = vmatpush1.bf16.msra.mxu0 0
    %181 = vmatprep.subr.bf16.mxu0 0
    %182 = vmatpush1.bf16.msra.mxu0 0
    %183 = vmatprep.subr.bf16.mxu0 0
    %184 = vmatpush1.bf16.msra.mxu0 0
    %185 = vmatprep.subr.bf16.mxu0 0
    %186 = vmatpush1.bf16.msra.mxu0 0
    %187 = vmatprep.subr.bf16.mxu0 0
    %188 = vmatpush1.bf16.msra.mxu0 0
    %189 = vmatprep.subr.bf16.mxu0 0
    %190 = vmatpush1.bf16.msra.mxu0 0
    %191 = vmatprep.mubr.bf16.mxu0 0
    %192 = vmatmul.mubr.bf16.gmra.mrb[0].mxu0 %v87
    %v193 = vpop.f32.mrb[0].mxu0
    %v194 = vadd.f32 %v109, %v193
    %v195 = vpop.f32.mrb[0].mxu0
    %v196 = vpop.f32.mrb[0].mxu0
    %v197 = vpop.f32.mrb[0].mxu0
    %198 = vdwg.mxu0
    %199 = vst [vmem:[#allocation2] sm:$0xff] %v194
    // Predicated region
    $region22: #{_mlp_forecast_impl.1} parent=1 // pred_check
      _
    $region23: #{_mlp_forecast_impl.1} parent=1 // pred_check_branch
      %201 = sbr.rel (0) target = $region25
    $region24: #{_mlp_forecast_impl.1} parent=1 // pred_region
      %s203 = ssub.s32 128, 128
      %204 = vsyncadd [#allocation3], %s203
      %s206 = sshll.u32 [#allocation2], 4
      %s207 = int_to_ptr.vmem [resolvable:$true] %s206
      %209 = dma.vmem_to_hbm [thread:$0]  %s207, 128, %s5, [#allocation3]
    $region25: #{_mlp_forecast_impl.1} parent=1 // pred_fallthru
      _
    // Predicated region
    $region26: #{_mlp_forecast_impl.1} parent=1 // pred_check
      _
    $region27: #{_mlp_forecast_impl.1} parent=1 // pred_check_branch
      %211 = sbr.rel (0) target = $region29
    $region28: #{_mlp_forecast_impl.1} parent=1 // pred_region
      %212 = dma.done [#allocation3], 128
    $region29: #{_mlp_forecast_impl.1} parent=1 // pred_fallthru
      _
    %213 = vsyncpa [#allocation3], 1

</llo_original>
